<compile_context>
chip_gen: v7x
topology: tpu7x:2x2x1
jax: 0.10.0
libtpu: 0.0.40
codegen_flags: <defaults>
</compile_context>

<pallas_src>
import jax
import jax.numpy as jnp
from jax.experimental import pallas as pl
from jax.experimental.pallas import tpu as pltpu


# ----------------------------- Pallas kernel -------------------------------

def relation_kernel(x_ref, win_ref, wcom_ref, wtail_ref, b_ref, o_ref):
    """Fully fused feature-major forward.

    x_ref    : (Dv + S*Dr, TB) bf16   [x_vector^T ; x_buffer flattened^T]
    win_ref  : (H + S*H, Dv + S*Dr) bf16   block-diag first layer (vec + S rel)
    wcom_ref : (H, 2H) bf16           [Wcv | Wcr/S]  (vw2/rw2/mean folded in)
    wtail_ref: (H + Dout, H) bf16     [cw2^T ; fused-heads^T]
    b_ref    : (H + S*H, 4) f32       cols: [b_in, cb1', cb2, hb]
    o_ref    : (Dout, TB) f32         fused head outputs
    """
    f32 = jnp.float32
    bf16 = jnp.bfloat16

    H = wcom_ref.shape[0]
    Dout = o_ref.shape[0]
    SH = win_ref.shape[0] - H
    S = SH // H

    b = b_ref[...]                               # (H + S*H, 4)
    b_in = b[:, 0:1]                             # (H + S*H, 1)
    cb1 = b[:H, 1:2]                             # (H, 1)  already includes folded vb2/rb2
    cb2 = b[:H, 2:3]
    hb = b[:Dout, 3:4]

    # ---- fused first layer (vec + all S neighbors): one MXU op, one tanh ----
    pre = jnp.dot(win_ref[...], x_ref[...], preferred_element_type=f32) + b_in
    h = jnp.tanh(pre)                            # (H + S*H, TB), f32

    v_h = h[:H]                                  # tanh(vec first layer)
    r_sum = h[H:2 * H]                           # neighbor sum (mean folded into Wcr)
    for s in range(1, S):                        # static, 7 sublane-aligned VPU adds
        r_sum = r_sum + h[(s + 1) * H:(s + 2) * H]

    # ---- com layer 1: single K-concat matmul on [v_h ; r_sum] ----
    stacked = jnp.concatenate([v_h, r_sum], axis=0).astype(bf16)   # (2H, TB)
    c = jnp.tanh(jnp.dot(wcom_ref[...], stacked, preferred_element_type=f32) + cb1)

    # ---- com layer 2 + fused heads (one matmul each, lane-dense store) ----
    wtail = wtail_ref[...]
    cw2t = wtail[:H]                             # (H, H)
    hwt = wtail[H:H + Dout]                      # (Dout, H)
    c2 = jnp.tanh(jnp.dot(cw2t, c.astype(bf16), preferred_element_type=f32) + cb2)
    o_ref[...] = (jnp.dot(hwt, c2.astype(bf16), preferred_element_type=f32)
                  + hb).astype(o_ref.dtype)


# ------------------------------- wrapper ------------------------------------

def _num_tensorcores():
    """Best-effort TensorCore-per-device count (megacore chips -> 2)."""
    try:
        kind = jax.devices()[0].device_kind.lower()
    except Exception:
        return 1
    if "v6" in kind or "lite" in kind or "v5e" in kind or "v2" in kind or "v3" in kind:
        return 1
    if "v4" in kind or "v5p" in kind or "v5 p" in kind or "v7" in kind:
        return 2
    return 1


def _pick_batch_tile(B, n_cores):
    """Largest lane-aligned tile dividing B (cap 4096).  On 1-TC chips a single
    big tile is preferred; on megacore chips keep >=n_cores parallel steps so
    the batch grid shards across TensorCores."""
    if B <= 128 or B % 128 != 0:
        return B                               # single full block (still legal)
    cands = [c for c in range(128, min(B, 4096) + 1, 128) if B % c == 0]
    if n_cores > 1:
        multi = [c for c in cands if B // c >= n_cores]
        if multi:
            return max(multi)
    return max(cands)


def relation_forward(x_vector, x_buffer, params, *, batch_tile=None):
    B, Dv = x_vector.shape
    Bb, S, Dr = x_buffer.shape
    assert Bb == B

    Hv1 = params["vw1"].shape[1]
    Hv = params["vw2"].shape[1]
    Hr1 = params["rw1"].shape[1]
    Hr = params["rw2"].shape[1]
    C1 = params["cw1"].shape[1]
    C2 = params["cw2"].shape[1]
    out1 = params["hw1"].shape[1]
    out2 = params["hw2"].shape[1]
    H = Hv
    # Packed-weight layout assumes a uniform hidden width (true for the
    # module's defaults: everything is 32).
    assert Hv1 == Hv == Hr1 == Hr == C1 == C2 == H
    Dout = out1 + out2

    if batch_tile is None:
        batch_tile = _pick_batch_tile(B, _num_tensorcores())
    assert B % batch_tile == 0, "batch must be divisible by batch_tile"
    TB = batch_tile

    f32 = jnp.float32
    bf16 = jnp.bfloat16

    # ---- feature-major, flattened input (batch on the lane axis) ----
    Din = Dv + S * Dr
    xb_flat = x_buffer.reshape(B, S * Dr).T               # (S*Dr, B), row = s*Dr + d
    x_all = jnp.concatenate([x_vector.T, xb_flat], axis=0).astype(bf16)   # (Din, B)

    # ---- pack / fold parameters (cheap one-time XLA ops) ----
    Min = H + S * H

    # Block-diagonal first layer: vec block + S copies of the rel block.
    w_in = jnp.zeros((Min, Din), f32)
    w_in = w_in.at[:H, :Dv].set(params["vw1"].T.astype(f32))
    rw1t = params["rw1"].T.astype(f32)                    # (H, Dr)
    for s in range(S):
        w_in = w_in.at[H + s * H:H + (s + 1) * H,
                       Dv + s * Dr:Dv + (s + 1) * Dr].set(rw1t)
    w_in = w_in.astype(bf16)

    # Fold vw2/rw2 (+ the 1/S neighbor mean) into the com first layer.
    cw1_v = params["cw1"][:H].astype(f32)                 # (H, H) vec rows
    cw1_r = params["cw1"][H:].astype(f32)                 # (H, H) rel rows
    w_cv = cw1_v.T @ params["vw2"].T.astype(f32)          # (H, H)
    w_cr = cw1_r.T @ params["rw2"].T.astype(f32)          # (H, H)
    w_com = jnp.concatenate([w_cv, w_cr / S], axis=1).astype(bf16)   # (H, 2H)

    cb1p = (params["cb1"][0].astype(f32)
            + cw1_v.T @ params["vb2"][0].astype(f32)
            + cw1_r.T @ params["rb2"][0].astype(f32))     # (H,)

    # Second com layer + fused heads.
    hwt = jnp.concatenate([params["hw1"], params["hw2"]], axis=1).T  # (Dout, H)
    w_tail = jnp.concatenate([params["cw2"].T.astype(f32),
                              hwt.astype(f32)], axis=0).astype(bf16)  # (H+Dout, H)

    # Packed biases (f32): [b_in, cb1', cb2, hb] as columns.
    b_in = jnp.concatenate([params["vb1"][0].astype(f32),
                            jnp.tile(params["rb1"][0].astype(f32), S)])   # (Min,)
    hb = jnp.concatenate([params["hb1"][0], params["hb2"][0]]).astype(f32)  # (Dout,)

    def col(v):
        out = jnp.zeros((Min,), f32)
        return out.at[:v.shape[0]].set(v)

    b_pack = jnp.stack([b_in, col(cb1p), col(params["cb2"][0].astype(f32)),
                        col(hb)], axis=1)                 # (Min, 4)

    grid = (B // TB,)
    in_specs = [
        pl.BlockSpec((Din, TB), lambda i: (0, i)),        # x_all
        pl.BlockSpec(w_in.shape, lambda i: (0, 0)),       # block-diag first layer
        pl.BlockSpec(w_com.shape, lambda i: (0, 0)),      # folded com layer 1
        pl.BlockSpec(w_tail.shape, lambda i: (0, 0)),     # com layer 2 + heads
        pl.BlockSpec(b_pack.shape, lambda i: (0, 0)),     # packed biases
    ]
    out_specs = pl.BlockSpec((Dout, TB), lambda i: (0, i))
    out_shape = jax.ShapeDtypeStruct((Dout, B), f32)

    fn = pl.pallas_call(
        relation_kernel,
        out_shape=out_shape,
        grid_spec=pltpu.PrefetchScalarGridSpec(
            num_scalar_prefetch=0,
            grid=grid,
            in_specs=in_specs,
            out_specs=out_specs,
        ),
        compiler_params=pltpu.CompilerParams(
            dimension_semantics=("parallel",),
            vmem_limit_bytes=32 * 1024 * 1024,
        ),
    )
    out_t = fn(x_all, w_in, w_com, w_tail, b_pack)        # (Dout, B)
    return [out_t[:out1].T, out_t[out1:].T]


# -------------------------- deterministic params ----------------------------

def make_params(key, *, vec_in=4, rel_in=4, vec_hidden=32, vec_head=32,
                rel_hidden=32, rel_head=32, com_hidden=(32, 32),
                output_sizes=(2, 2)):
    """Deterministic synthetic init (kaiming-uniform-like scale); weights stored
    as (in, out) so y = x @ W + b matches torch.nn.Linear with W = weight.T."""
    def linear(k, fan_in, fan_out):
        kw, kb = jax.random.split(k)
        bound = jnp.sqrt(1.0 / fan_in)
        w = jax.random.uniform(kw, (fan_in, fan_out), jnp.float32, -bound, bound)
        b = jax.random.uniform(kb, (1, fan_out), jnp.float32, -bound, bound)
        return w, b

    ks = jax.random.split(key, 8)
    p = {}
    p["vw1"], p["vb1"] = linear(ks[0], vec_in, vec_hidden)
    p["vw2"], p["vb2"] = linear(ks[1], vec_hidden, vec_head)
    p["rw1"], p["rb1"] = linear(ks[2], rel_in, rel_hidden)
    p["rw2"], p["rb2"] = linear(ks[3], rel_hidden, rel_head)
    p["cw1"], p["cb1"] = linear(ks[4], vec_head + rel_head, com_hidden[0])
    p["cw2"], p["cb2"] = linear(ks[5], com_hidden[0], com_hidden[1])
    p["hw1"], p["hb1"] = linear(ks[6], com_hidden[1], output_sizes[0])
    p["hw2"], p["hb2"] = linear(ks[7], com_hidden[1], output_sizes[1])
    return p


# --------------------------- plain-JAX reference -----------------------------

def relation_reference(x_vector, x_buffer, p):
    v = jnp.tanh(x_vector @ p["vw1"] + p["vb1"])
    v = v @ p["vw2"] + p["vb2"]
    r = jnp.tanh(x_buffer @ p["rw1"] + p["rb1"][None])
    r = r @ p["rw2"] + p["rb2"][None]
    r = jnp.mean(r, axis=-2)
    c = jnp.concatenate([v, r], axis=-1)
    c = jnp.tanh(c @ p["cw1"] + p["cb1"])
    c = jnp.tanh(c @ p["cw2"] + p["cb2"])
    return [c @ p["hw1"] + p["hb1"], c @ p["hw2"] + p["hb2"]]


# --------------------------------- main --------------------------------------

if __name__ == "__main__":
    key = jax.random.PRNGKey(0)
    k_params, k_vec, k_buf = jax.random.split(key, 3)

    B, S, Dv, Dr = 256, 8, 4, 4
    params = make_params(k_params, vec_in=Dv, rel_in=Dr)

    x_vector = jax.random.normal(k_vec, (B, Dv), jnp.float32)
    x_buffer = jax.random.normal(k_buf, (B, S, Dr), jnp.float32)

    out1, out2 = relation_forward(x_vector, x_buffer, params)
    jax.block_until_ready((out1, out2))

    # Reference in full f32 precision (kernel uses bf16 MXU operands, so the
    # comparison tolerance is loosened accordingly).
    with jax.default_matmul_precision("highest"):
        ref1, ref2 = relation_reference(x_vector, x_buffer, params)
        jax.block_until_ready((ref1, ref2))

    assert out1.shape == (B, 2) and out2.shape == (B, 2)
    assert jnp.allclose(out1, ref1, atol=3e-2, rtol=3e-2)
    assert jnp.allclose(out2, ref2, atol=3e-2, rtol=3e-2)

    print("KERNEL_OK")
</pallas_src>

<mosaic_0001>
module attributes {stable_mosaic.version = 11 : i64} {
  func.func @relation_kernel(%arg0: i32, %arg1: memref<36x256xbf16, #tpu.memory_space<vmem>>, %arg2: memref<288x36xbf16, #tpu.memory_space<vmem>>, %arg3: memref<32x64xbf16, #tpu.memory_space<vmem>>, %arg4: memref<36x32xbf16, #tpu.memory_space<vmem>>, %arg5: memref<288x4xf32, #tpu.memory_space<vmem>>, %arg6: memref<4x256xf32, #tpu.memory_space<vmem>>) attributes {dimension_semantics = [#tpu.dimension_semantics<parallel>], iteration_bounds = array<i64: 1>, scalar_prefetch = 0 : i64, scratch_operands = 0 : i64, tpu.core_type = #tpu.core_type<tc>, window_params = [{transform_indices = @transform_0, window_bounds = array<i64: 36, 256>}, {pipeline_mode = #tpu.pipeline_mode<synchronous>, transform_indices = @transform_1, window_bounds = array<i64: 288, 36>}, {pipeline_mode = #tpu.pipeline_mode<synchronous>, transform_indices = @transform_2, window_bounds = array<i64: 32, 64>}, {pipeline_mode = #tpu.pipeline_mode<synchronous>, transform_indices = @transform_3, window_bounds = array<i64: 36, 32>}, {pipeline_mode = #tpu.pipeline_mode<synchronous>, transform_indices = @transform_4, window_bounds = array<i64: 288, 4>}, {transform_indices = @transform_5, window_bounds = array<i64: 4, 256>}]} {
    %c0 = arith.constant 0 : index
    %c0_0 = arith.constant 0 : index
    %0 = vector.load %arg5[%c0, %c0_0] : memref<288x4xf32, #tpu.memory_space<vmem>>, vector<288x4xf32>
    %1 = vector.extract_strided_slice %0 {offsets = [0, 0], sizes = [288, 1], strides = [1, 1]} : vector<288x4xf32> to vector<288x1xf32>
    %2 = vector.extract_strided_slice %0 {offsets = [0, 1], sizes = [32, 1], strides = [1, 1]} : vector<288x4xf32> to vector<32x1xf32>
    %3 = vector.extract_strided_slice %0 {offsets = [0, 2], sizes = [32, 1], strides = [1, 1]} : vector<288x4xf32> to vector<32x1xf32>
    %4 = vector.extract_strided_slice %0 {offsets = [0, 3], sizes = [4, 1], strides = [1, 1]} : vector<288x4xf32> to vector<4x1xf32>
    %c0_1 = arith.constant 0 : index
    %c0_2 = arith.constant 0 : index
    %5 = vector.load %arg2[%c0_1, %c0_2] : memref<288x36xbf16, #tpu.memory_space<vmem>>, vector<288x36xbf16>
    %c0_3 = arith.constant 0 : index
    %c0_4 = arith.constant 0 : index
    %6 = vector.load %arg1[%c0_3, %c0_4] : memref<36x256xbf16, #tpu.memory_space<vmem>>, vector<36x256xbf16>
    %cst = arith.constant dense<0.000000e+00> : vector<288x256xf32>
    %7 = tpu.matmul %5, %6, %cst {dimension_numbers = #tpu.dot_dimension_numbers<[1], [0], [0], [1], [0, 0, 1, 1], [], []>} : vector<288x36xbf16>, vector<36x256xbf16>, vector<288x256xf32> -> vector<288x256xf32>
    %8 = vector.broadcast %1 : vector<288x1xf32> to vector<288x256xf32>
    %9 = arith.addf %7, %8 : vector<288x256xf32>
    %10 = math.tanh %9 : vector<288x256xf32>
    %11 = vector.extract_strided_slice %10 {offsets = [0, 0], sizes = [32, 256], strides = [1, 1]} : vector<288x256xf32> to vector<32x256xf32>
    %12 = vector.extract_strided_slice %10 {offsets = [32, 0], sizes = [32, 256], strides = [1, 1]} : vector<288x256xf32> to vector<32x256xf32>
    %13 = vector.extract_strided_slice %10 {offsets = [64, 0], sizes = [32, 256], strides = [1, 1]} : vector<288x256xf32> to vector<32x256xf32>
    %14 = arith.addf %12, %13 : vector<32x256xf32>
    %15 = vector.extract_strided_slice %10 {offsets = [96, 0], sizes = [32, 256], strides = [1, 1]} : vector<288x256xf32> to vector<32x256xf32>
    %16 = arith.addf %14, %15 : vector<32x256xf32>
    %17 = vector.extract_strided_slice %10 {offsets = [128, 0], sizes = [32, 256], strides = [1, 1]} : vector<288x256xf32> to vector<32x256xf32>
    %18 = arith.addf %16, %17 : vector<32x256xf32>
    %19 = vector.extract_strided_slice %10 {offsets = [160, 0], sizes = [32, 256], strides = [1, 1]} : vector<288x256xf32> to vector<32x256xf32>
    %20 = arith.addf %18, %19 : vector<32x256xf32>
    %21 = vector.extract_strided_slice %10 {offsets = [192, 0], sizes = [32, 256], strides = [1, 1]} : vector<288x256xf32> to vector<32x256xf32>
    %22 = arith.addf %20, %21 : vector<32x256xf32>
    %23 = vector.extract_strided_slice %10 {offsets = [224, 0], sizes = [32, 256], strides = [1, 1]} : vector<288x256xf32> to vector<32x256xf32>
    %24 = arith.addf %22, %23 : vector<32x256xf32>
    %25 = vector.extract_strided_slice %10 {offsets = [256, 0], sizes = [32, 256], strides = [1, 1]} : vector<288x256xf32> to vector<32x256xf32>
    %26 = arith.addf %24, %25 : vector<32x256xf32>
    %27 = tpu.concatenate %11, %26 in 0 : vector<32x256xf32>, vector<32x256xf32> -> vector<64x256xf32>
    %28 = arith.truncf %27 : vector<64x256xf32> to vector<64x256xbf16>
    %c0_5 = arith.constant 0 : index
    %c0_6 = arith.constant 0 : index
    %29 = vector.load %arg3[%c0_5, %c0_6] : memref<32x64xbf16, #tpu.memory_space<vmem>>, vector<32x64xbf16>
    %cst_7 = arith.constant dense<0.000000e+00> : vector<32x256xf32>
    %30 = tpu.matmul %29, %28, %cst_7 {dimension_numbers = #tpu.dot_dimension_numbers<[1], [0], [0], [1], [0, 0, 1, 1], [], []>} : vector<32x64xbf16>, vector<64x256xbf16>, vector<32x256xf32> -> vector<32x256xf32>
    %31 = vector.broadcast %2 : vector<32x1xf32> to vector<32x256xf32>
    %32 = arith.addf %30, %31 : vector<32x256xf32>
    %33 = math.tanh %32 : vector<32x256xf32>
    %c0_8 = arith.constant 0 : index
    %c0_9 = arith.constant 0 : index
    %34 = vector.load %arg4[%c0_8, %c0_9] : memref<36x32xbf16, #tpu.memory_space<vmem>>, vector<36x32xbf16>
    %35 = vector.extract_strided_slice %34 {offsets = [0, 0], sizes = [32, 32], strides = [1, 1]} : vector<36x32xbf16> to vector<32x32xbf16>
    %36 = vector.extract_strided_slice %34 {offsets = [32, 0], sizes = [4, 32], strides = [1, 1]} : vector<36x32xbf16> to vector<4x32xbf16>
    %37 = arith.truncf %33 : vector<32x256xf32> to vector<32x256xbf16>
    %cst_10 = arith.constant dense<0.000000e+00> : vector<32x256xf32>
    %38 = tpu.matmul %35, %37, %cst_10 {dimension_numbers = #tpu.dot_dimension_numbers<[1], [0], [0], [1], [0, 0, 1, 1], [], []>} : vector<32x32xbf16>, vector<32x256xbf16>, vector<32x256xf32> -> vector<32x256xf32>
    %39 = vector.broadcast %3 : vector<32x1xf32> to vector<32x256xf32>
    %40 = arith.addf %38, %39 : vector<32x256xf32>
    %41 = math.tanh %40 : vector<32x256xf32>
    %42 = arith.truncf %41 : vector<32x256xf32> to vector<32x256xbf16>
    %cst_11 = arith.constant dense<0.000000e+00> : vector<4x256xf32>
    %43 = tpu.matmul %36, %42, %cst_11 {dimension_numbers = #tpu.dot_dimension_numbers<[1], [0], [0], [1], [0, 0, 1, 1], [], []>} : vector<4x32xbf16>, vector<32x256xbf16>, vector<4x256xf32> -> vector<4x256xf32>
    %44 = vector.broadcast %4 : vector<4x1xf32> to vector<4x256xf32>
    %45 = arith.addf %43, %44 : vector<4x256xf32>
    %c0_12 = arith.constant 0 : index
    %c0_13 = arith.constant 0 : index
    %46 = vector.load %arg6[%c0_12, %c0_13] : memref<4x256xf32, #tpu.memory_space<vmem>>, vector<4x256xf32>
    tpu.vector_store %arg6[%c0_12, %c0_13], %45 {strides = array<i32>} : memref<4x256xf32, #tpu.memory_space<vmem>>, vector<4x256xf32>,
    return
  }
  func.func @transform_0(%arg0: i32) -> (i32, i32) {
    %c0_i32 = arith.constant 0 : i32
    %c0_i32_0 = arith.constant 0 : i32
    return %c0_i32, %arg0 : i32, i32
  }
  func.func @transform_1(%arg0: i32) -> (i32, i32) {
    %c0_i32 = arith.constant 0 : i32
    %c0_i32_0 = arith.constant 0 : i32
    %c0_i32_1 = arith.constant 0 : i32
    return %c0_i32, %c0_i32_0 : i32, i32
  }
  func.func @transform_2(%arg0: i32) -> (i32, i32) {
    %c0_i32 = arith.constant 0 : i32
    %c0_i32_0 = arith.constant 0 : i32
    %c0_i32_1 = arith.constant 0 : i32
    return %c0_i32, %c0_i32_0 : i32, i32
  }
  func.func @transform_3(%arg0: i32) -> (i32, i32) {
    %c0_i32 = arith.constant 0 : i32
    %c0_i32_0 = arith.constant 0 : i32
    %c0_i32_1 = arith.constant 0 : i32
    return %c0_i32, %c0_i32_0 : i32, i32
  }
  func.func @transform_4(%arg0: i32) -> (i32, i32) {
    %c0_i32 = arith.constant 0 : i32
    %c0_i32_0 = arith.constant 0 : i32
    %c0_i32_1 = arith.constant 0 : i32
    return %c0_i32, %c0_i32_0 : i32, i32
  }
  func.func @transform_5(%arg0: i32) -> (i32, i32) {
    %c0_i32 = arith.constant 0 : i32
    %c0_i32_0 = arith.constant 0 : i32
    return %c0_i32, %arg0 : i32, i32
  }
}

</mosaic_0001>

<llo_original>
// kernel: tpu_custom_call.1
$region0: #{tpu_custom_call.1}
  #allocation0 [shape = 'u32[]', space=smem, size = 0x4, offset = 0x4, fixed_abs, tag = 'smem constant byte address 0x4 - core index']
  #allocation1 [shape = 'u32[144,128]{1,0:T(1,128)}', space=vmem, size = 0x12000, scoped, tag = 'internal scratch']
  %s0 = inlined_call_operand.vmem [shape: bf16[36,256], index: 0, kind: input, shape index: {}]
  %s1 = inlined_call_operand.vmem [shape: bf16[288,36], index: 1, kind: input, shape index: {}]
  %s2 = inlined_call_operand.vmem [shape: bf16[32,64], index: 2, kind: input, shape index: {}]
  %s3 = inlined_call_operand.vmem [shape: bf16[36,32], index: 3, kind: input, shape index: {}]
  %s4 = inlined_call_operand.vmem [shape: f32[288,4], index: 4, kind: input, shape index: {}]
  %s5 = inlined_call_operand.hbm [shape: f32[4,256], index: 5, kind: output, shape index: {}]
  %s6 = sld [smem:[#allocation0]]
  $region30: #{tpu_custom_call.1} parent=0
    _
  %s8 = ssub.s32 1, %s6
  %s9 = scalar_select 0, %s8, %s6
  $region1: #{tpu_custom_call.1} parent=0
    #allocation2 [shape = 'u8[4096]{0}', space=vmem, size = 0x1000, scoped, tag = 'output window, operand 0, single buffered']
    #allocation3 [shape = 's32[1]{0}', space=sflag, size = 0x4, scoped, tag = 'scoped memory for tpu_custom_call.1']
    %10 = vsyncpa [#allocation3], 0
    // Predicated region
    $region2: #{tpu_custom_call.1} parent=1 // pred_check
      _
    $region3: #{tpu_custom_call.1} parent=1 // pred_check_branch
      %12 = sbr.rel (0) target = $region5
    $region4: #{tpu_custom_call.1} parent=1 // pred_region
      _
    $region5: #{tpu_custom_call.1} parent=1 // pred_fallthru
      _
    // Predicated region
    $region6: #{tpu_custom_call.1} parent=1 // pred_check
      _
    $region7: #{tpu_custom_call.1} parent=1 // pred_check_branch
      %14 = sbr.rel (0) target = $region9
    $region8: #{tpu_custom_call.1} parent=1 // pred_region
      _
    $region9: #{tpu_custom_call.1} parent=1 // pred_fallthru
      _
    // Predicated region
    $region10: #{tpu_custom_call.1} parent=1 // pred_check
      _
    $region11: #{tpu_custom_call.1} parent=1 // pred_check_branch
      %16 = sbr.rel (0) target = $region13
    $region12: #{tpu_custom_call.1} parent=1 // pred_region
      _
    $region13: #{tpu_custom_call.1} parent=1 // pred_fallthru
      _
    // Predicated region
    $region14: #{tpu_custom_call.1} parent=1 // pred_check
      _
    $region15: #{tpu_custom_call.1} parent=1 // pred_check_branch
      %18 = sbr.rel (0) target = $region17
    $region16: #{tpu_custom_call.1} parent=1 // pred_region
      _
    $region17: #{tpu_custom_call.1} parent=1 // pred_fallthru
      _
    // Predicated region
    $region18: #{tpu_custom_call.1} parent=1 // pred_check
      _
    $region19: #{tpu_custom_call.1} parent=1 // pred_check_branch
      %20 = sbr.rel (0) target = $region21
    $region20: #{tpu_custom_call.1} parent=1 // pred_region
      _
    $region21: #{tpu_custom_call.1} parent=1 // pred_fallthru
      _
    %v22 = vld [vmem:[%s4] sm:$0xff]
    %v23 = vld [vmem:[%s4 + $0x8] sm:$0xff]
    %v24 = vld [vmem:[%s4 + $0x10] sm:$0xff]
    %v25 = vld [vmem:[%s4 + $0x18] sm:$0xff]
    %v26 = vld [vmem:[%s4 + $0x20] sm:$0xff]
    %v27 = vld [vmem:[%s4 + $0x28] sm:$0xff]
    %v28 = vld [vmem:[%s4 + $0x30] sm:$0xff]
    %v29 = vld [vmem:[%s4 + $0x38] sm:$0xff]
    %v30 = vld [vmem:[%s4 + $0x40] sm:$0xff]
    %v31 = vld [vmem:[%s4 + $0x48] sm:$0xff]
    %v32 = vld [vmem:[%s4 + $0x50] sm:$0xff]
    %v33 = vld [vmem:[%s4 + $0x58] sm:$0xff]
    %v34 = vld [vmem:[%s4 + $0x60] sm:$0xff]
    %v35 = vld [vmem:[%s4 + $0x68] sm:$0xff]
    %v36 = vld [vmem:[%s4 + $0x70] sm:$0xff]
    %v37 = vld [vmem:[%s4 + $0x78] sm:$0xff]
    %v38 = vld [vmem:[%s4 + $0x80] sm:$0xff]
    %v39 = vld [vmem:[%s4 + $0x88] sm:$0xff]
    %v40 = vld [vmem:[%s4 + $0x90] sm:$0xff]
    %v41 = vld [vmem:[%s4 + $0x98] sm:$0xff]
    %v42 = vld [vmem:[%s4 + $0xa0] sm:$0xff]
    %v43 = vld [vmem:[%s4 + $0xa8] sm:$0xff]
    %v44 = vld [vmem:[%s4 + $0xb0] sm:$0xff]
    %v45 = vld [vmem:[%s4 + $0xb8] sm:$0xff]
    %v46 = vld [vmem:[%s4 + $0xc0] sm:$0xff]
    %v47 = vld [vmem:[%s4 + $0xc8] sm:$0xff]
    %v48 = vld [vmem:[%s4 + $0xd0] sm:$0xff]
    %v49 = vld [vmem:[%s4 + $0xd8] sm:$0xff]
    %v50 = vld [vmem:[%s4 + $0xe0] sm:$0xff]
    %v51 = vld [vmem:[%s4 + $0xe8] sm:$0xff]
    %v52 = vld [vmem:[%s4 + $0xf0] sm:$0xff]
    %v53 = vld [vmem:[%s4 + $0xf8] sm:$0xff]
    %v54 = vld [vmem:[%s4 + $0x100] sm:$0xff]
    %v55 = vld [vmem:[%s4 + $0x108] sm:$0xff]
    %v56 = vld [vmem:[%s4 + $0x110] sm:$0xff]
    %v57 = vld [vmem:[%s4 + $0x118] sm:$0xff]
    %v58 = vld [vmem:[%s1] sm:$0xf]
    %v59 = vld [vmem:[%s1 + $0x4] sm:$0xf]
    %v60 = vld [vmem:[%s1 + $0x8] sm:$0xf]
    %v61 = vld [vmem:[%s1 + $0xc] sm:$0xf]
    %v62 = vld [vmem:[%s1 + $0x10] sm:$0xf]
    %v63 = vld [vmem:[%s1 + $0x14] sm:$0xf]
    %v64 = vld [vmem:[%s1 + $0x18] sm:$0xf]
    %v65 = vld [vmem:[%s1 + $0x1c] sm:$0xf]
    %v66 = vld [vmem:[%s1 + $0x20] sm:$0xf]
    %v67 = vld [vmem:[%s1 + $0x24] sm:$0xf]
    %v68 = vld [vmem:[%s1 + $0x28] sm:$0xf]
    %v69 = vld [vmem:[%s1 + $0x2c] sm:$0xf]
    %v70 = vld [vmem:[%s1 + $0x30] sm:$0xf]
    %v71 = vld [vmem:[%s1 + $0x34] sm:$0xf]
    %v72 = vld [vmem:[%s1 + $0x38] sm:$0xf]
    %v73 = vld [vmem:[%s1 + $0x3c] sm:$0xf]
    %v74 = vld [vmem:[%s1 + $0x40] sm:$0xf]
    %v75 = vld [vmem:[%s1 + $0x44] sm:$0xf]
    %v76 = vld [vmem:[%s1 + $0x48] sm:$0xf]
    %v77 = vld [vmem:[%s1 + $0x4c] sm:$0xf]
    %v78 = vld [vmem:[%s1 + $0x50] sm:$0xf]
    %v79 = vld [vmem:[%s1 + $0x54] sm:$0xf]
    %v80 = vld [vmem:[%s1 + $0x58] sm:$0xf]
    %v81 = vld [vmem:[%s1 + $0x5c] sm:$0xf]
    %v82 = vld [vmem:[%s1 + $0x60] sm:$0xf]
    %v83 = vld [vmem:[%s1 + $0x64] sm:$0xf]
    %v84 = vld [vmem:[%s1 + $0x68] sm:$0xf]
    %v85 = vld [vmem:[%s1 + $0x6c] sm:$0xf]
    %v86 = vld [vmem:[%s1 + $0x70] sm:$0xf]
    %v87 = vld [vmem:[%s1 + $0x74] sm:$0xf]
    %v88 = vld [vmem:[%s1 + $0x78] sm:$0xf]
    %v89 = vld [vmem:[%s1 + $0x7c] sm:$0xf]
    %v90 = vld [vmem:[%s1 + $0x80] sm:$0xf]
    %v91 = vld [vmem:[%s1 + $0x84] sm:$0xf]
    %v92 = vld [vmem:[%s1 + $0x88] sm:$0xf]
    %v93 = vld [vmem:[%s1 + $0x8c] sm:$0xf]
    %v94 = vld [vmem:[%s0] sm:$0xff]
    %v95 = vld [vmem:[%s0 + $0x8] sm:$0xff]
    %v96 = vld [vmem:[%s0 + $0x10] sm:$0xff]
    %v97 = vld [vmem:[%s0 + $0x18] sm:$0xff]
    %v98 = vld [vmem:[%s0 + $0x20] sm:$0x33]
    %100 = vset.pattern.permute.xlu0 0
    %101 = vperm.xlu0 %100, %v22
    %v102 = vpop.permute.xlu0 %101
    %105 = vset.pattern.permute.xlu0 0
    %106 = vperm.xlu0 %105, %v23
    %v107 = vpop.permute.xlu0 %106
    %110 = vset.pattern.permute.xlu0 0
    %111 = vperm.xlu0 %110, %v24
    %v112 = vpop.permute.xlu0 %111
    %115 = vset.pattern.permute.xlu0 0
    %116 = vperm.xlu0 %115, %v25
    %v117 = vpop.permute.xlu0 %116
    %120 = vset.pattern.permute.xlu0 0
    %121 = vperm.xlu0 %120, %v26
    %v122 = vpop.permute.xlu0 %121
    %125 = vset.pattern.permute.xlu0 0
    %126 = vperm.xlu0 %125, %v27
    %v127 = vpop.permute.xlu0 %126
    %130 = vset.pattern.permute.xlu0 0
    %131 = vperm.xlu0 %130, %v28
    %v132 = vpop.permute.xlu0 %131
    %135 = vset.pattern.permute.xlu0 0
    %136 = vperm.xlu0 %135, %v29
    %v137 = vpop.permute.xlu0 %136
    %140 = vset.pattern.permute.xlu0 0
    %141 = vperm.xlu0 %140, %v30
    %v142 = vpop.permute.xlu0 %141
    %145 = vset.pattern.permute.xlu0 0
    %146 = vperm.xlu0 %145, %v31
    %v147 = vpop.permute.xlu0 %146
    %150 = vset.pattern.permute.xlu0 0
    %151 = vperm.xlu0 %150, %v32
    %v152 = vpop.permute.xlu0 %151
    %155 = vset.pattern.permute.xlu0 0
    %156 = vperm.xlu0 %155, %v33
    %v157 = vpop.permute.xlu0 %156
    %160 = vset.pattern.permute.xlu0 0
    %161 = vperm.xlu0 %160, %v34
    %v162 = vpop.permute.xlu0 %161
    %165 = vset.pattern.permute.xlu0 0
    %166 = vperm.xlu0 %165, %v35
    %v167 = vpop.permute.xlu0 %166
    %170 = vset.pattern.permute.xlu0 0
    %171 = vperm.xlu0 %170, %v36
    %v172 = vpop.permute.xlu0 %171
    %175 = vset.pattern.permute.xlu0 0
    %176 = vperm.xlu0 %175, %v37
    %v177 = vpop.permute.xlu0 %176
    %180 = vset.pattern.permute.xlu0 0
    %181 = vperm.xlu0 %180, %v38
    %v182 = vpop.permute.xlu0 %181
    %185 = vset.pattern.permute.xlu0 0
    %186 = vperm.xlu0 %185, %v39
    %v187 = vpop.permute.xlu0 %186
    %190 = vset.pattern.permute.xlu0 0
    %191 = vperm.xlu0 %190, %v40
    %v192 = vpop.permute.xlu0 %191
    %195 = vset.pattern.permute.xlu0 0
    %196 = vperm.xlu0 %195, %v41
    %v197 = vpop.permute.xlu0 %196
    %200 = vset.pattern.permute.xlu0 0
    %201 = vperm.xlu0 %200, %v42
    %v202 = vpop.permute.xlu0 %201
    %205 = vset.pattern.permute.xlu0 0
    %206 = vperm.xlu0 %205, %v43
    %v207 = vpop.permute.xlu0 %206
    %210 = vset.pattern.permute.xlu0 0
    %211 = vperm.xlu0 %210, %v44
    %v212 = vpop.permute.xlu0 %211
    %215 = vset.pattern.permute.xlu0 0
    %216 = vperm.xlu0 %215, %v45
    %v217 = vpop.permute.xlu0 %216
    %220 = vset.pattern.permute.xlu0 0
    %221 = vperm.xlu0 %220, %v46
    %v222 = vpop.permute.xlu0 %221
    %225 = vset.pattern.permute.xlu0 0
    %226 = vperm.xlu0 %225, %v47
    %v227 = vpop.permute.xlu0 %226
    %230 = vset.pattern.permute.xlu0 0
    %231 = vperm.xlu0 %230, %v48
    %v232 = vpop.permute.xlu0 %231
    %235 = vset.pattern.permute.xlu0 0
    %236 = vperm.xlu0 %235, %v49
    %v237 = vpop.permute.xlu0 %236
    %240 = vset.pattern.permute.xlu0 0
    %241 = vperm.xlu0 %240, %v50
    %v242 = vpop.permute.xlu0 %241
    %245 = vset.pattern.permute.xlu0 0
    %246 = vperm.xlu0 %245, %v51
    %v247 = vpop.permute.xlu0 %246
    %250 = vset.pattern.permute.xlu0 0
    %251 = vperm.xlu0 %250, %v52
    %v252 = vpop.permute.xlu0 %251
    %255 = vset.pattern.permute.xlu0 0
    %256 = vperm.xlu0 %255, %v53
    %v257 = vpop.permute.xlu0 %256
    %260 = vset.pattern.permute.xlu0 0
    %261 = vperm.xlu0 %260, %v54
    %v262 = vpop.permute.xlu0 %261
    %265 = vset.pattern.permute.xlu0 0
    %266 = vperm.xlu0 %265, %v55
    %v267 = vpop.permute.xlu0 %266
    %270 = vset.pattern.permute.xlu0 0
    %271 = vperm.xlu0 %270, %v56
    %v272 = vpop.permute.xlu0 %271
    %275 = vset.pattern.permute.xlu0 0
    %276 = vperm.xlu0 %275, %v57
    %v277 = vpop.permute.xlu0 %276
    %v315 = vunpack.c.l.b16 %v58
    %v316 = vunpack.c.l.b16 %v59
    %v317 = vunpack.c.l.b16 %v60
    %v318 = vunpack.c.l.b16 %v61
    %v319 = vunpack.c.l.b16 %v62
    %v320 = vunpack.c.l.b16 %v63
    %v321 = vunpack.c.l.b16 %v64
    %v322 = vunpack.c.l.b16 %v65
    %v323 = vunpack.c.l.b16 %v66
    %v324 = vunpack.c.l.b16 %v67
    %v325 = vunpack.c.l.b16 %v68
    %v326 = vunpack.c.l.b16 %v69
    %v327 = vunpack.c.l.b16 %v70
    %v328 = vunpack.c.l.b16 %v71
    %v329 = vunpack.c.l.b16 %v72
    %v330 = vunpack.c.l.b16 %v73
    %v331 = vunpack.c.l.b16 %v74
    %v332 = vunpack.c.l.b16 %v75
    %v333 = vunpack.c.l.b16 %v76
    %v334 = vunpack.c.l.b16 %v77
    %v335 = vunpack.c.l.b16 %v78
    %v336 = vunpack.c.l.b16 %v79
    %v337 = vunpack.c.l.b16 %v80
    %v338 = vunpack.c.l.b16 %v81
    %v339 = vunpack.c.l.b16 %v82
    %v340 = vunpack.c.l.b16 %v83
    %v341 = vunpack.c.l.b16 %v84
    %v342 = vunpack.c.l.b16 %v85
    %v343 = vunpack.c.l.b16 %v86
    %v344 = vunpack.c.l.b16 %v87
    %v345 = vunpack.c.l.b16 %v88
    %v346 = vunpack.c.l.b16 %v89
    %v347 = vunpack.c.l.b16 %v90
    %v348 = vunpack.c.l.b16 %v91
    %v349 = vunpack.c.l.b16 %v92
    %v350 = vunpack.c.l.b16 %v93
    %v351 = vpack.c.b16 %v316, %v315
    %v352 = vpack.c.b16 %v318, %v317
    %v353 = vpack.c.b16 %v320, %v319
    %v354 = vpack.c.b16 %v322, %v321
    %v355 = vpack.c.b16 %v324, %v323
    %v356 = vpack.c.b16 %v326, %v325
    %v357 = vpack.c.b16 %v328, %v327
    %v358 = vpack.c.b16 %v330, %v329
    %v359 = vpack.c.b16 %v332, %v331
    %v360 = vpack.c.b16 %v334, %v333
    %v361 = vpack.c.b16 %v336, %v335
    %v362 = vpack.c.b16 %v338, %v337
    %v363 = vpack.c.b16 %v340, %v339
    %v364 = vpack.c.b16 %v342, %v341
    %v365 = vpack.c.b16 %v344, %v343
    %v366 = vpack.c.b16 %v346, %v345
    %v367 = vpack.c.b16 %v348, %v347
    %v368 = vpack.c.b16 %v350, %v349
    %v374 = vunpack.c.l.b16 %v94
    %v375 = vunpack.c.h.b16 %v94
    %v376 = vunpack.c.l.b16 %v95
    %v377 = vunpack.c.h.b16 %v95
    %v378 = vunpack.c.l.b16 %v96
    %v379 = vunpack.c.h.b16 %v96
    %v380 = vunpack.c.l.b16 %v97
    %v381 = vunpack.c.h.b16 %v97
    %v382 = vunpack.c.l.b16 %v98
    %v383 = vunpack.c.h.b16 %v98
    %v384 = vpack.c.b16 %v376, %v374
    %v385 = vpack.c.b16 %v377, %v375
    %v386 = vpack.c.b16 %v380, %v378
    %v387 = vpack.c.b16 %v381, %v379
    %v388 = vpack.c.b16 %v382, %v382
    %v389 = vpack.c.b16 %v383, %v383
    %vm394 = vcmask 293888
    %v396 = vsel %vm394, %v351, 0
    %v399 = vsel %vm394, %v352, 0
    %v402 = vsel %vm394, %v353, 0
    %v405 = vsel %vm394, %v354, 0
    %v408 = vsel %vm394, %v355, 0
    %v411 = vsel %vm394, %v356, 0
    %v414 = vsel %vm394, %v357, 0
    %v417 = vsel %vm394, %v358, 0
    %v420 = vsel %vm394, %v359, 0
    %v423 = vsel %vm394, %v360, 0
    %v426 = vsel %vm394, %v361, 0
    %v429 = vsel %vm394, %v362, 0
    %v432 = vsel %vm394, %v363, 0
    %v435 = vsel %vm394, %v364, 0
    %v438 = vsel %vm394, %v365, 0
    %v441 = vsel %vm394, %v366, 0
    %v444 = vsel %vm394, %v367, 0
    %v447 = vsel %vm394, %v368, 0
    %vm449 = vcmask 1041408
    %v451 = vsel %vm449, %v388, 0
    %v454 = vsel %vm449, %v389, 0
    %456 = vmatprep.subr.bf16.mxu0 %v385
    %457 = vmatpush1.bf16.msra.mxu0 %v384
    %458 = vmatprep.subr.bf16.mxu0 %v387
    %459 = vmatpush1.bf16.msra.mxu0 %v386
    %460 = vmatprep.subr.bf16.mxu0 %v454
    %461 = vmatpush1.bf16.msra.mxu0 %v451
    %462 = vmatprep.subr.bf16.mxu0 0
    %463 = vmatpush1.bf16.msra.mxu0 0
    %464 = vmatprep.subr.bf16.mxu0 0
    %465 = vmatpush1.bf16.msra.mxu0 0
    %466 = vmatprep.subr.bf16.mxu0 0
    %467 = vmatpush1.bf16.msra.mxu0 0
    %468 = vmatprep.subr.bf16.mxu0 0
    %469 = vmatpush1.bf16.msra.mxu0 0
    %470 = vmatprep.subr.bf16.mxu0 0
    %471 = vmatpush1.bf16.msra.mxu0 0
    %472 = vmatprep.subr.bf16.mxu0 0
    %473 = vmatpush1.bf16.msra.mxu0 0
    %474 = vmatprep.subr.bf16.mxu0 0
    %475 = vmatpush1.bf16.msra.mxu0 0
    %476 = vmatprep.subr.bf16.mxu0 0
    %477 = vmatpush1.bf16.msra.mxu0 0
    %478 = vmatprep.subr.bf16.mxu0 0
    %479 = vmatpush1.bf16.msra.mxu0 0
    %480 = vmatprep.subr.bf16.mxu0 0
    %481 = vmatpush1.bf16.msra.mxu0 0
    %482 = vmatprep.subr.bf16.mxu0 0
    %483 = vmatpush1.bf16.msra.mxu0 0
    %484 = vmatprep.subr.bf16.mxu0 0
    %485 = vmatpush1.bf16.msra.mxu0 0
    %486 = vmatprep.subr.bf16.mxu0 0
    %487 = vmatpush1.bf16.msra.mxu0 0
    %488 = vmatprep.mubr.bf16.mxu0 0
    %489 = vmatmul.mubr.bf16.gmra.mrb[0].mxu0 %v396
    %v490 = vpop.f32.mrb[0].mxu0
    %v491 = vadd.f32 %v102, %v490
    %v492 = vpop.f32.mrb[0].mxu0
    %v493 = vadd.f32 %v102, %v492
    %v494 = vpop.f32.mrb[0].mxu0
    %v495 = vadd.f32 %v107, %v494
    %v496 = vpop.f32.mrb[0].mxu0
    %v497 = vadd.f32 %v107, %v496
    %498 = vmatprep.mubr.bf16.mxu0 0
    %499 = vmatmul.mubr.bf16.gmra.mrb[0].mxu0 %v399
    %v500 = vpop.f32.mrb[0].mxu0
    %v501 = vadd.f32 %v112, %v500
    %v502 = vpop.f32.mrb[0].mxu0
    %v503 = vadd.f32 %v112, %v502
    %v504 = vpop.f32.mrb[0].mxu0
    %v505 = vadd.f32 %v117, %v504
    %v506 = vpop.f32.mrb[0].mxu0
    %v507 = vadd.f32 %v117, %v506
    %508 = vmatprep.mubr.bf16.mxu0 0
    %509 = vmatmul.mubr.bf16.gmra.mrb[0].mxu0 %v402
    %v510 = vpop.f32.mrb[0].mxu0
    %v511 = vadd.f32 %v122, %v510
    %v512 = vpop.f32.mrb[0].mxu0
    %v513 = vadd.f32 %v122, %v512
    %v514 = vpop.f32.mrb[0].mxu0
    %v515 = vadd.f32 %v127, %v514
    %v516 = vpop.f32.mrb[0].mxu0
    %v517 = vadd.f32 %v127, %v516
    %518 = vmatprep.mubr.bf16.mxu0 0
    %519 = vmatmul.mubr.bf16.gmra.mrb[0].mxu0 %v405
    %v520 = vpop.f32.mrb[0].mxu0
    %v521 = vadd.f32 %v132, %v520
    %v522 = vpop.f32.mrb[0].mxu0
    %v523 = vadd.f32 %v132, %v522
    %v524 = vpop.f32.mrb[0].mxu0
    %v525 = vadd.f32 %v137, %v524
    %v526 = vpop.f32.mrb[0].mxu0
    %v527 = vadd.f32 %v137, %v526
    %528 = vmatprep.mubr.bf16.mxu0 0
    %529 = vmatmul.mubr.bf16.gmra.mrb[0].mxu0 %v408
    %v530 = vpop.f32.mrb[0].mxu0
    %v531 = vadd.f32 %v142, %v530
    %v532 = vpop.f32.mrb[0].mxu0
    %v533 = vadd.f32 %v142, %v532
    %v534 = vpop.f32.mrb[0].mxu0
    %v535 = vadd.f32 %v147, %v534
    %v536 = vpop.f32.mrb[0].mxu0
    %v537 = vadd.f32 %v147, %v536
    %538 = vmatprep.mubr.bf16.mxu0 0
    %539 = vmatmul.mubr.bf16.gmra.mrb[0].mxu0 %v411
    %v540 = vpop.f32.mrb[0].mxu0
    %v541 = vadd.f32 %v152, %v540
    %v542 = vpop.f32.mrb[0].mxu0
    %v543 = vadd.f32 %v152, %v542
    %v544 = vpop.f32.mrb[0].mxu0
    %v545 = vadd.f32 %v157, %v544
    %v546 = vpop.f32.mrb[0].mxu0
    %v547 = vadd.f32 %v157, %v546
    %548 = vmatprep.mubr.bf16.mxu0 0
    %549 = vmatmul.mubr.bf16.gmra.mrb[0].mxu0 %v414
    %v550 = vpop.f32.mrb[0].mxu0
    %v551 = vadd.f32 %v162, %v550
    %v552 = vpop.f32.mrb[0].mxu0
    %v553 = vadd.f32 %v162, %v552
    %v554 = vpop.f32.mrb[0].mxu0
    %v555 = vadd.f32 %v167, %v554
    %v556 = vpop.f32.mrb[0].mxu0
    %v557 = vadd.f32 %v167, %v556
    %558 = vmatprep.mubr.bf16.mxu0 0
    %559 = vmatmul.mubr.bf16.gmra.mrb[0].mxu0 %v417
    %v560 = vpop.f32.mrb[0].mxu0
    %v561 = vadd.f32 %v172, %v560
    %v562 = vpop.f32.mrb[0].mxu0
    %v563 = vadd.f32 %v172, %v562
    %v564 = vpop.f32.mrb[0].mxu0
    %v565 = vadd.f32 %v177, %v564
    %v566 = vpop.f32.mrb[0].mxu0
    %v567 = vadd.f32 %v177, %v566
    %568 = vmatprep.mubr.bf16.mxu0 0
    %569 = vmatmul.mubr.bf16.gmra.mrb[0].mxu0 %v420
    %v570 = vpop.f32.mrb[0].mxu0
    %v571 = vadd.f32 %v182, %v570
    %v572 = vpop.f32.mrb[0].mxu0
    %v573 = vadd.f32 %v182, %v572
    %v574 = vpop.f32.mrb[0].mxu0
    %v575 = vadd.f32 %v187, %v574
    %v576 = vpop.f32.mrb[0].mxu0
    %v577 = vadd.f32 %v187, %v576
    %578 = vmatprep.mubr.bf16.mxu0 0
    %579 = vmatmul.mubr.bf16.gmra.mrb[0].mxu0 %v423
    %v580 = vpop.f32.mrb[0].mxu0
    %v581 = vadd.f32 %v192, %v580
    %v582 = vpop.f32.mrb[0].mxu0
    %v583 = vadd.f32 %v192, %v582
    %v584 = vpop.f32.mrb[0].mxu0
    %v585 = vadd.f32 %v197, %v584
    %v586 = vpop.f32.mrb[0].mxu0
    %v587 = vadd.f32 %v197, %v586
    %588 = vmatprep.mubr.bf16.mxu0 0
    %589 = vmatmul.mubr.bf16.gmra.mrb[0].mxu0 %v426
    %v590 = vpop.f32.mrb[0].mxu0
    %v591 = vadd.f32 %v202, %v590
    %v592 = vpop.f32.mrb[0].mxu0
    %v593 = vadd.f32 %v202, %v592
    %v594 = vpop.f32.mrb[0].mxu0
    %v595 = vadd.f32 %v207, %v594
    %v596 = vpop.f32.mrb[0].mxu0
    %v597 = vadd.f32 %v207, %v596
    %598 = vmatprep.mubr.bf16.mxu0 0
    %599 = vmatmul.mubr.bf16.gmra.mrb[0].mxu0 %v429
    %v600 = vpop.f32.mrb[0].mxu0
    %v601 = vadd.f32 %v212, %v600
    %v602 = vpop.f32.mrb[0].mxu0
    %v603 = vadd.f32 %v212, %v602
    %v604 = vpop.f32.mrb[0].mxu0
    %v605 = vadd.f32 %v217, %v604
    %v606 = vpop.f32.mrb[0].mxu0
    %v607 = vadd.f32 %v217, %v606
    %608 = vmatprep.mubr.bf16.mxu0 0
    %609 = vmatmul.mubr.bf16.gmra.mrb[0].mxu0 %v432
    %v610 = vpop.f32.mrb[0].mxu0
    %v611 = vadd.f32 %v222, %v610
    %v612 = vpop.f32.mrb[0].mxu0
    %v613 = vadd.f32 %v222, %v612
    %v614 = vpop.f32.mrb[0].mxu0
    %v615 = vadd.f32 %v227, %v614
    %v616 = vpop.f32.mrb[0].mxu0
    %v617 = vadd.f32 %v227, %v616
    %618 = vmatprep.mubr.bf16.mxu0 0
    %619 = vmatmul.mubr.bf16.gmra.mrb[0].mxu0 %v435
    %v620 = vpop.f32.mrb[0].mxu0
    %v621 = vadd.f32 %v232, %v620
    %v622 = vpop.f32.mrb[0].mxu0
    %v623 = vadd.f32 %v232, %v622
    %v624 = vpop.f32.mrb[0].mxu0
    %v625 = vadd.f32 %v237, %v624
    %v626 = vpop.f32.mrb[0].mxu0
    %v627 = vadd.f32 %v237, %v626
    %628 = vmatprep.mubr.bf16.mxu0 0
    %629 = vmatmul.mubr.bf16.gmra.mrb[0].mxu0 %v438
    %v630 = vpop.f32.mrb[0].mxu0
    %v631 = vadd.f32 %v242, %v630
    %v632 = vpop.f32.mrb[0].mxu0
    %v633 = vadd.f32 %v242, %v632
    %v634 = vpop.f32.mrb[0].mxu0
    %v635 = vadd.f32 %v247, %v634
    %v636 = vpop.f32.mrb[0].mxu0
    %v637 = vadd.f32 %v247, %v636
    %638 = vmatprep.mubr.bf16.mxu0 0
    %639 = vmatmul.mubr.bf16.gmra.mrb[0].mxu0 %v441
    %v640 = vpop.f32.mrb[0].mxu0
    %v641 = vadd.f32 %v252, %v640
    %v642 = vpop.f32.mrb[0].mxu0
    %v643 = vadd.f32 %v252, %v642
    %v644 = vpop.f32.mrb[0].mxu0
    %v645 = vadd.f32 %v257, %v644
    %v646 = vpop.f32.mrb[0].mxu0
    %v647 = vadd.f32 %v257, %v646
    %648 = vmatprep.mubr.bf16.mxu0 0
    %649 = vmatmul.mubr.bf16.gmra.mrb[0].mxu0 %v444
    %v650 = vpop.f32.mrb[0].mxu0
    %v651 = vadd.f32 %v262, %v650
    %v652 = vpop.f32.mrb[0].mxu0
    %v653 = vadd.f32 %v262, %v652
    %v654 = vpop.f32.mrb[0].mxu0
    %v655 = vadd.f32 %v267, %v654
    %v656 = vpop.f32.mrb[0].mxu0
    %v657 = vadd.f32 %v267, %v656
    %658 = vmatprep.mubr.bf16.mxu0 0
    %659 = vmatmul.mubr.bf16.gmra.mrb[0].mxu0 %v447
    %v660 = vpop.f32.mrb[0].mxu0
    %v661 = vadd.f32 %v272, %v660
    %v662 = vpop.f32.mrb[0].mxu0
    %v663 = vadd.f32 %v272, %v662
    %v664 = vpop.f32.mrb[0].mxu0
    %v665 = vadd.f32 %v277, %v664
    %v666 = vpop.f32.mrb[0].mxu0
    %v667 = vadd.f32 %v277, %v666
    %668 = vdwg.mxu0
    %v669 = vtanh.pop %v491
    %v670 = vtanh.pop %v493
    %v671 = vtanh.pop %v495
    %v672 = vtanh.pop %v497
    %v673 = vtanh.pop %v501
    %v674 = vtanh.pop %v503
    %v675 = vtanh.pop %v505
    %v676 = vtanh.pop %v507
    %v677 = vtanh.pop %v511
    %v678 = vtanh.pop %v513
    %v679 = vtanh.pop %v515
    %v680 = vtanh.pop %v517
    %v681 = vtanh.pop %v521
    %v682 = vtanh.pop %v523
    %v683 = vtanh.pop %v525
    %v684 = vtanh.pop %v527
    %v685 = vtanh.pop %v531
    %v686 = vtanh.pop %v533
    %v687 = vtanh.pop %v535
    %v688 = vtanh.pop %v537
    %v689 = vtanh.pop %v541
    %v690 = vtanh.pop %v543
    %v691 = vtanh.pop %v545
    %v692 = vtanh.pop %v547
    %v693 = vtanh.pop %v551
    %v694 = vtanh.pop %v553
    %v695 = vtanh.pop %v555
    %v696 = vtanh.pop %v557
    %v697 = vtanh.pop %v561
    %v698 = vtanh.pop %v563
    %v699 = vtanh.pop %v565
    %v700 = vtanh.pop %v567
    %v701 = vtanh.pop %v571
    %v702 = vtanh.pop %v573
    %v703 = vtanh.pop %v575
    %v704 = vtanh.pop %v577
    %v705 = vtanh.pop %v581
    %v706 = vtanh.pop %v583
    %v707 = vtanh.pop %v585
    %v708 = vtanh.pop %v587
    %v709 = vtanh.pop %v591
    %v710 = vtanh.pop %v593
    %v711 = vtanh.pop %v595
    %v712 = vtanh.pop %v597
    %v713 = vtanh.pop %v601
    %v714 = vtanh.pop %v603
    %v715 = vtanh.pop %v605
    %v716 = vtanh.pop %v607
    %v717 = vtanh.pop %v611
    %v718 = vtanh.pop %v613
    %v719 = vtanh.pop %v615
    %v720 = vtanh.pop %v617
    %v721 = vtanh.pop %v621
    %v722 = vtanh.pop %v623
    %v723 = vtanh.pop %v625
    %v724 = vtanh.pop %v627
    %v725 = vtanh.pop %v631
    %v726 = vtanh.pop %v633
    %v727 = vtanh.pop %v635
    %v728 = vtanh.pop %v637
    %v729 = vtanh.pop %v641
    %v730 = vtanh.pop %v643
    %v731 = vtanh.pop %v645
    %v732 = vtanh.pop %v647
    %v733 = vtanh.pop %v651
    %v734 = vtanh.pop %v653
    %v735 = vtanh.pop %v655
    %v736 = vtanh.pop %v657
    %v737 = vtanh.pop %v661
    %v738 = vtanh.pop %v663
    %v739 = vtanh.pop %v665
    %v740 = vtanh.pop %v667
    %v741 = vadd.f32 %v677, %v685
    %v742 = vadd.f32 %v678, %v686
    %v743 = vadd.f32 %v679, %v687
    %v744 = vadd.f32 %v680, %v688
    %v745 = vadd.f32 %v681, %v689
    %v746 = vadd.f32 %v682, %v690
    %v747 = vadd.f32 %v683, %v691
    %v748 = vadd.f32 %v684, %v692
    %v749 = vadd.f32 %v741, %v693
    %v750 = vadd.f32 %v742, %v694
    %v751 = vadd.f32 %v743, %v695
    %v752 = vadd.f32 %v744, %v696
    %v753 = vadd.f32 %v745, %v697
    %v754 = vadd.f32 %v746, %v698
    %v755 = vadd.f32 %v747, %v699
    %v756 = vadd.f32 %v748, %v700
    %v757 = vadd.f32 %v749, %v701
    %v758 = vadd.f32 %v750, %v702
    %v759 = vadd.f32 %v751, %v703
    %v760 = vadd.f32 %v752, %v704
    %v761 = vadd.f32 %v753, %v705
    %v762 = vadd.f32 %v754, %v706
    %v763 = vadd.f32 %v755, %v707
    %v764 = vadd.f32 %v756, %v708
    %v765 = vadd.f32 %v757, %v709
    %v766 = vadd.f32 %v758, %v710
    %v767 = vadd.f32 %v759, %v711
    %v768 = vadd.f32 %v760, %v712
    %v769 = vadd.f32 %v761, %v713
    %v770 = vadd.f32 %v762, %v714
    %v771 = vadd.f32 %v763, %v715
    %v772 = vadd.f32 %v764, %v716
    %v773 = vadd.f32 %v765, %v717
    %v774 = vadd.f32 %v766, %v718
    %v775 = vadd.f32 %v767, %v719
    %v776 = vadd.f32 %v768, %v720
    %v777 = vadd.f32 %v769, %v721
    %v778 = vadd.f32 %v770, %v722
    %v779 = vadd.f32 %v771, %v723
    %v780 = vadd.f32 %v772, %v724
    %v781 = vadd.f32 %v773, %v725
    %v782 = vadd.f32 %v774, %v726
    %v783 = vadd.f32 %v775, %v727
    %v784 = vadd.f32 %v776, %v728
    %v785 = vadd.f32 %v777, %v729
    %v786 = vadd.f32 %v778, %v730
    %v787 = vadd.f32 %v779, %v731
    %v788 = vadd.f32 %v780, %v732
    %v789 = vadd.f32 %v781, %v733
    %v790 = vadd.f32 %v782, %v734
    %v791 = vadd.f32 %v783, %v735
    %v792 = vadd.f32 %v784, %v736
    %v793 = vadd.f32 %v785, %v737
    %v794 = vadd.f32 %v786, %v738
    %v795 = vadd.f32 %v787, %v739
    %v796 = vadd.f32 %v788, %v740
    %v797 = vpack.c.bf16 %v671, %v669
    %v798 = vpack.c.bf16 %v672, %v670
    %v799 = vpack.c.bf16 %v675, %v673
    %v800 = vpack.c.bf16 %v676, %v674
    %v801 = vpack.c.bf16 %v791, %v789
    %v802 = vpack.c.bf16 %v792, %v790
    %v803 = vpack.c.bf16 %v795, %v793
    %v804 = vpack.c.bf16 %v796, %v794
    %v805 = vld [vmem:[%s2] sm:$0xf]
    %v806 = vld [vmem:[%s2 + $0x4] sm:$0xf]
    %v807 = vld [vmem:[%s2 + $0x8] sm:$0xf]
    %v808 = vld [vmem:[%s2 + $0xc] sm:$0xf]
    %809 = vset.pattern.permute.xlu0 1
    %810 = vperm.xlu0 %809, %v22
    %v811 = vpop.permute.xlu0 %810
    %813 = vset.pattern.permute.xlu0 1
    %814 = vperm.xlu0 %813, %v23
    %v815 = vpop.permute.xlu0 %814
    %817 = vset.pattern.permute.xlu0 1
    %818 = vperm.xlu0 %817, %v24
    %v819 = vpop.permute.xlu0 %818
    %821 = vset.pattern.permute.xlu0 1
    %822 = vperm.xlu0 %821, %v25
    %v823 = vpop.permute.xlu0 %822
    %v829 = vunpack.c.l.b16 %v805
    %v830 = vunpack.c.l.b16 %v806
    %v831 = vunpack.c.l.b16 %v807
    %v832 = vunpack.c.l.b16 %v808
    %v833 = vpack.c.b16 %v830, %v829
    %v834 = vpack.c.b16 %v832, %v831
    %vm835 = vcmask 523264
    %v837 = vsel %vm835, %v833, 0
    %v840 = vsel %vm835, %v834, 0
    %842 = vmatprep.subr.bf16.mxu0 %v798
    %843 = vmatpush1.bf16.msra.mxu0 %v797
    %844 = vmatprep.subr.bf16.mxu0 %v800
    %845 = vmatpush1.bf16.msra.mxu0 %v799
    %846 = vmatprep.subr.bf16.mxu0 %v802
    %847 = vmatpush1.bf16.msra.mxu0 %v801
    %848 = vmatprep.subr.bf16.mxu0 %v804
    %849 = vmatpush1.bf16.msra.mxu0 %v803
    %850 = vmatprep.subr.bf16.mxu0 0
    %851 = vmatpush1.bf16.msra.mxu0 0
    %852 = vmatprep.subr.bf16.mxu0 0
    %853 = vmatpush1.bf16.msra.mxu0 0
    %854 = vmatprep.subr.bf16.mxu0 0
    %855 = vmatpush1.bf16.msra.mxu0 0
    %856 = vmatprep.subr.bf16.mxu0 0
    %857 = vmatpush1.bf16.msra.mxu0 0
    %858 = vmatprep.subr.bf16.mxu0 0
    %859 = vmatpush1.bf16.msra.mxu0 0
    %860 = vmatprep.subr.bf16.mxu0 0
    %861 = vmatpush1.bf16.msra.mxu0 0
    %862 = vmatprep.subr.bf16.mxu0 0
    %863 = vmatpush1.bf16.msra.mxu0 0
    %864 = vmatprep.subr.bf16.mxu0 0
    %865 = vmatpush1.bf16.msra.mxu0 0
    %866 = vmatprep.subr.bf16.mxu0 0
    %867 = vmatpush1.bf16.msra.mxu0 0
    %868 = vmatprep.subr.bf16.mxu0 0
    %869 = vmatpush1.bf16.msra.mxu0 0
    %870 = vmatprep.subr.bf16.mxu0 0
    %871 = vmatpush1.bf16.msra.mxu0 0
    %872 = vmatprep.subr.bf16.mxu0 0
    %873 = vmatpush1.bf16.msra.mxu0 0
    %874 = vmatprep.mubr.bf16.mxu0 0
    %875 = vmatmul.mubr.bf16.gmra.mrb[0].mxu0 %v837
    %v876 = vpop.f32.mrb[0].mxu0
    %v877 = vadd.f32 %v811, %v876
    %v878 = vpop.f32.mrb[0].mxu0
    %v879 = vadd.f32 %v811, %v878
    %v880 = vpop.f32.mrb[0].mxu0
    %v881 = vadd.f32 %v815, %v880
    %v882 = vpop.f32.mrb[0].mxu0
    %v883 = vadd.f32 %v815, %v882
    %884 = vmatprep.mubr.bf16.mxu0 0
    %885 = vmatmul.mubr.bf16.gmra.mrb[0].mxu0 %v840
    %v886 = vpop.f32.mrb[0].mxu0
    %v887 = vadd.f32 %v819, %v886
    %v888 = vpop.f32.mrb[0].mxu0
    %v889 = vadd.f32 %v819, %v888
    %v890 = vpop.f32.mrb[0].mxu0
    %v891 = vadd.f32 %v823, %v890
    %v892 = vpop.f32.mrb[0].mxu0
    %v893 = vadd.f32 %v823, %v892
    %894 = vdwg.mxu0
    %v895 = vtanh.pop %v877
    %v896 = vtanh.pop %v879
    %v897 = vtanh.pop %v881
    %v898 = vtanh.pop %v883
    %v899 = vtanh.pop %v887
    %v900 = vtanh.pop %v889
    %v901 = vtanh.pop %v891
    %v902 = vtanh.pop %v893
    %v903 = vld [vmem:[%s3] sm:$0xf]
    %v904 = vld [vmem:[%s3 + $0x4] sm:$0xf]
    %v905 = vld [vmem:[%s3 + $0x8] sm:$0xf]
    %v906 = vld [vmem:[%s3 + $0xc] sm:$0xf]
    %v907 = vld [vmem:[%s3 + $0x10] sm:$0x3]
    %v908 = vpack.c.bf16 %v897, %v895
    %v909 = vpack.c.bf16 %v898, %v896
    %v910 = vpack.c.bf16 %v901, %v899
    %v911 = vpack.c.bf16 %v902, %v900
    %912 = vset.pattern.permute.xlu0 2
    %913 = vperm.xlu0 %912, %v22
    %v914 = vpop.permute.xlu0 %913
    %916 = vset.pattern.permute.xlu0 2
    %917 = vperm.xlu0 %916, %v23
    %v918 = vpop.permute.xlu0 %917
    %920 = vset.pattern.permute.xlu0 2
    %921 = vperm.xlu0 %920, %v24
    %v922 = vpop.permute.xlu0 %921
    %924 = vset.pattern.permute.xlu0 2
    %925 = vperm.xlu0 %924, %v25
    %v926 = vpop.permute.xlu0 %925
    %v932 = vunpack.c.l.b16 %v903
    %v933 = vunpack.c.l.b16 %v904
    %v934 = vunpack.c.l.b16 %v905
    %v935 = vunpack.c.l.b16 %v906
    %v936 = vpack.c.b16 %v933, %v932
    %v937 = vpack.c.b16 %v935, %v934
    %vm938 = vcmask 261120
    %v940 = vsel %vm938, %v936, 0
    %v943 = vsel %vm938, %v937, 0
    %945 = vmatprep.subr.bf16.mxu0 %v909
    %946 = vmatpush1.bf16.msra.mxu0 %v908
    %947 = vmatprep.subr.bf16.mxu0 %v911
    %948 = vmatpush1.bf16.msra.mxu0 %v910
    %949 = vmatprep.subr.bf16.mxu0 0
    %950 = vmatpush1.bf16.msra.mxu0 0
    %951 = vmatprep.subr.bf16.mxu0 0
    %952 = vmatpush1.bf16.msra.mxu0 0
    %953 = vmatprep.subr.bf16.mxu0 0
    %954 = vmatpush1.bf16.msra.mxu0 0
    %955 = vmatprep.subr.bf16.mxu0 0
    %956 = vmatpush1.bf16.msra.mxu0 0
    %957 = vmatprep.subr.bf16.mxu0 0
    %958 = vmatpush1.bf16.msra.mxu0 0
    %959 = vmatprep.subr.bf16.mxu0 0
    %960 = vmatpush1.bf16.msra.mxu0 0
    %961 = vmatprep.subr.bf16.mxu0 0
    %962 = vmatpush1.bf16.msra.mxu0 0
    %963 = vmatprep.subr.bf16.mxu0 0
    %964 = vmatpush1.bf16.msra.mxu0 0
    %965 = vmatprep.subr.bf16.mxu0 0
    %966 = vmatpush1.bf16.msra.mxu0 0
    %967 = vmatprep.subr.bf16.mxu0 0
    %968 = vmatpush1.bf16.msra.mxu0 0
    %969 = vmatprep.subr.bf16.mxu0 0
    %970 = vmatpush1.bf16.msra.mxu0 0
    %971 = vmatprep.subr.bf16.mxu0 0
    %972 = vmatpush1.bf16.msra.mxu0 0
    %973 = vmatprep.subr.bf16.mxu0 0
    %974 = vmatpush1.bf16.msra.mxu0 0
    %975 = vmatprep.subr.bf16.mxu0 0
    %976 = vmatpush1.bf16.msra.mxu0 0
    %977 = vmatprep.mubr.bf16.mxu0 0
    %978 = vmatmul.mubr.bf16.gmra.mrb[0].mxu0 %v940
    %v979 = vpop.f32.mrb[0].mxu0
    %v980 = vadd.f32 %v914, %v979
    %v981 = vpop.f32.mrb[0].mxu0
    %v982 = vadd.f32 %v914, %v981
    %v983 = vpop.f32.mrb[0].mxu0
    %v984 = vadd.f32 %v918, %v983
    %v985 = vpop.f32.mrb[0].mxu0
    %v986 = vadd.f32 %v918, %v985
    %987 = vmatprep.mubr.bf16.mxu0 0
    %988 = vmatmul.mubr.bf16.gmra.mrb[0].mxu0 %v943
    %v989 = vpop.f32.mrb[0].mxu0
    %v990 = vadd.f32 %v922, %v989
    %v991 = vpop.f32.mrb[0].mxu0
    %v992 = vadd.f32 %v922, %v991
    %v993 = vpop.f32.mrb[0].mxu0
    %v994 = vadd.f32 %v926, %v993
    %v995 = vpop.f32.mrb[0].mxu0
    %v996 = vadd.f32 %v926, %v995
    %997 = vdwg.mxu0
    %v998 = vtanh.pop %v980
    %v999 = vtanh.pop %v982
    %v1000 = vtanh.pop %v984
    %v1001 = vtanh.pop %v986
    %v1002 = vtanh.pop %v990
    %v1003 = vtanh.pop %v992
    %v1004 = vtanh.pop %v994
    %v1005 = vtanh.pop %v996
    %v1006 = vpack.c.bf16 %v1000, %v998
    %v1007 = vpack.c.bf16 %v1001, %v999
    %v1008 = vpack.c.bf16 %v1004, %v1002
    %v1009 = vpack.c.bf16 %v1005, %v1003
    %1010 = vset.pattern.permute.xlu0 3
    %1011 = vperm.xlu0 %1010, %v22
    %v1012 = vpop.permute.xlu0 %1011
    %v1015 = vsel %vm938, %v907, 0
    %1017 = vmatprep.subr.bf16.mxu0 %v1007
    %1018 = vmatpush1.bf16.msra.mxu0 %v1006
    %1019 = vmatprep.subr.bf16.mxu0 %v1009
    %1020 = vmatpush1.bf16.msra.mxu0 %v1008
    %1021 = vmatprep.subr.bf16.mxu0 0
    %1022 = vmatpush1.bf16.msra.mxu0 0
    %1023 = vmatprep.subr.bf16.mxu0 0
    %1024 = vmatpush1.bf16.msra.mxu0 0
    %1025 = vmatprep.subr.bf16.mxu0 0
    %1026 = vmatpush1.bf16.msra.mxu0 0
    %1027 = vmatprep.subr.bf16.mxu0 0
    %1028 = vmatpush1.bf16.msra.mxu0 0
    %1029 = vmatprep.subr.bf16.mxu0 0
    %1030 = vmatpush1.bf16.msra.mxu0 0
    %1031 = vmatprep.subr.bf16.mxu0 0
    %1032 = vmatpush1.bf16.msra.mxu0 0
    %1033 = vmatprep.subr.bf16.mxu0 0
    %1034 = vmatpush1.bf16.msra.mxu0 0
    %1035 = vmatprep.subr.bf16.mxu0 0
    %1036 = vmatpush1.bf16.msra.mxu0 0
    %1037 = vmatprep.subr.bf16.mxu0 0
    %1038 = vmatpush1.bf16.msra.mxu0 0
    %1039 = vmatprep.subr.bf16.mxu0 0
    %1040 = vmatpush1.bf16.msra.mxu0 0
    %1041 = vmatprep.subr.bf16.mxu0 0
    %1042 = vmatpush1.bf16.msra.mxu0 0
    %1043 = vmatprep.subr.bf16.mxu0 0
    %1044 = vmatpush1.bf16.msra.mxu0 0
    %1045 = vmatprep.subr.bf16.mxu0 0
    %1046 = vmatpush1.bf16.msra.mxu0 0
    %1047 = vmatprep.subr.bf16.mxu0 0
    %1048 = vmatpush1.bf16.msra.mxu0 0
    %1049 = vmatprep.mubr.bf16.mxu0 0
    %1050 = vmatmul.mubr.bf16.gmra.mrb[0].mxu0 %v1015
    %v1051 = vpop.f32.mrb[0].mxu0
    %v1052 = vadd.f32 %v1012, %v1051
    %v1053 = vpop.f32.mrb[0].mxu0
    %v1054 = vadd.f32 %v1012, %v1053
    %v1055 = vpop.f32.mrb[0].mxu0
    %v1056 = vpop.f32.mrb[0].mxu0
    %1057 = vdwg.mxu0
    %v1060 = vcombine.low %v1052, %v1054
    %1062 = vst [vmem:[#allocation2] sm:$0xff] %v1060
    // Predicated region
    $region22: #{tpu_custom_call.1} parent=1 // pred_check
      _
    $region23: #{tpu_custom_call.1} parent=1 // pred_check_branch
      %1064 = sbr.rel (0) target = $region25
    $region24: #{tpu_custom_call.1} parent=1 // pred_region
      %s1066 = ssub.s32 128, 128
      %1067 = vsyncadd [#allocation3], %s1066
      %s1069 = sshll.u32 [#allocation2], 4
      %s1070 = int_to_ptr.vmem [resolvable:$true] %s1069
      %1072 = dma.vmem_to_hbm [thread:$0]  %s1070, 128, %s5, [#allocation3]
    $region25: #{tpu_custom_call.1} parent=1 // pred_fallthru
      _
    // Predicated region
    $region26: #{tpu_custom_call.1} parent=1 // pred_check
      _
    $region27: #{tpu_custom_call.1} parent=1 // pred_check_branch
      %1074 = sbr.rel (0) target = $region29
    $region28: #{tpu_custom_call.1} parent=1 // pred_region
      %1075 = dma.done [#allocation3], 128
    $region29: #{tpu_custom_call.1} parent=1 // pred_fallthru
      _
    %1076 = vsyncpa [#allocation3], 1

</llo_original>
